<compile_context>
chip_gen: v7x
topology: tpu7x:2x2x1
jax: 0.10.0
libtpu: 0.0.40
codegen_flags: <defaults>
</compile_context>

<pallas_src>
import math
import functools

import jax
import jax.numpy as jnp
from jax.experimental import pallas as pl
from jax.experimental.pallas import tpu as pltpu


_LANE = 128
_NEG_BIG = -1e30   # finite "minus infinity" (avoids inf-inf NaNs in the online lse)


def _round_up(v, mult):
    return ((v + mult - 1) // mult) * mult


def _vmem_capacity_bytes():
    try:
        return int(pltpu.get_tpu_info().vmem_capacity_bytes)
    except Exception:
        return 64 * 1024 * 1024          # conservative (v7x per-core VMEM)


def _tensorcores_per_device():
    # v4 / v5p (megacore) and v7x expose 2 TensorCores that a "parallel" grid
    # axis can be sharded across; v5e / v6e are single-core.  Fall back to 1.
    try:
        kind = jax.devices()[0].device_kind.lower()
    except Exception:
        return 1
    return 2 if any(t in kind for t in ("v4", "v5p", "v7")) else 1


def _aamsoftmax_kernel(x_ref, w_ref, lab_ref,
                       m_out, l_out, t_out,
                       xn_ref, m_ref, l_ref, t_ref,
                       *, cos_m, sin_m, th, mm, s, n_class, c_tile,
                       tiles_per_split, mm_dtype, need_mask):
    split = pl.program_id(0)
    k = pl.program_id(1)
    nk = pl.num_programs(1)
    tile_idx = split * tiles_per_split + k      # logical (unclamped) class tile

    # ---- per-split init: normalize x once, reset online-lse accumulators ----
    @pl.when(k == 0)
    def _init():
        x = x_ref[...].astype(jnp.float32)                        # (B, D)
        # F.normalize: x / max(||x||, 1e-12) == x * rsqrt(max(||x||^2, 1e-24))
        inv = jax.lax.rsqrt(
            jnp.maximum(jnp.sum(x * x, axis=-1, keepdims=True), 1e-24))
        xn_ref[...] = x * inv
        m_ref[...] = jnp.full_like(m_ref, _NEG_BIG)               # running max
        l_ref[...] = jnp.zeros_like(l_ref)                        # running sum-exp
        t_ref[...] = jnp.zeros_like(t_ref)                        # target logit

    # ---- weight tile: f32 squared row norms via a tiny ones-row MXU matmul
    #      (result lands directly in (1, Ct) lane-major layout, no transpose);
    #      cosine matmul in the weight's storage precision (bf16 -> native MXU).
    w = w_ref[...]                                                # (Ct, D) storage dtype
    wf = w.astype(jnp.float32)
    d = wf.shape[-1]
    w_sq = jax.lax.dot_general(
        jnp.ones((1, d), jnp.float32), wf * wf,
        dimension_numbers=(((1,), (1,)), ((), ())),
        preferred_element_type=jnp.float32)                       # (1, Ct)
    inv_w = jax.lax.rsqrt(jnp.maximum(w_sq, 1e-24))               # (1, Ct)

    xn_mm = xn_ref[...].astype(mm_dtype)                          # (B, D)
    w_mm = w.astype(mm_dtype)
    # Contract the LAST axis of both operands: no weight transpose/relayout.
    cosine = jax.lax.dot_general(
        xn_mm, w_mm,
        dimension_numbers=(((1,), (1,)), ((), ())),
        preferred_element_type=jnp.float32)                       # (B, Ct)
    cosine = cosine * inv_w                                       # post-matmul row-norm

    sine = jnp.sqrt(jnp.clip(1.0 - cosine * cosine, 0.0, 1.0))
    phi = cosine * cos_m - sine * sin_m
    phi = jnp.where(cosine - th > 0, phi, cosine - mm)

    b, ct = cosine.shape
    local_ids = jax.lax.broadcasted_iota(jnp.int32, (b, ct), 1)
    # NOTE: out-of-range / negative labels silently contribute a zero target
    # logit (loss == lse), mirroring the scatter_ behavior only for valid labels.
    lab_local = lab_ref[...] - tile_idx * c_tile                  # (B, 1)
    one_hot = local_ids == lab_local                              # (B, Ct) bool

    logits = jnp.where(one_hot, phi, cosine) * s
    if need_mask:
        # Ragged last tile / overflow split tiles: select-based masking so any
        # garbage (NaN/Inf) in the out-of-bounds tail cannot propagate.
        limit = n_class - tile_idx * c_tile
        logits = jnp.where(local_ids < limit, logits, _NEG_BIG)

    # Target logit straight from phi (one_hot never hits a padded class).
    t_ref[...] += jnp.sum(jnp.where(one_hot, phi, 0.0),
                          axis=-1, keepdims=True) * s

    # ---- online (streaming) logsumexp over class tiles ----
    m_prev = m_ref[...]
    m_new = jnp.maximum(m_prev, jnp.max(logits, axis=-1, keepdims=True))
    l_ref[...] = (l_ref[...] * jnp.exp(m_prev - m_new)
                  + jnp.sum(jnp.exp(logits - m_new), axis=-1, keepdims=True))
    m_ref[...] = m_new

    # ---- finalize this split: emit partial (m, l, t) for the JAX epilogue ----
    @pl.when(k == nk - 1)
    def _finish():
        m_out[...] = m_ref[...].reshape(m_out.shape)
        l_out[...] = l_ref[...].reshape(l_out.shape)
        t_out[...] = t_ref[...].reshape(t_out.shape)


def aamsoftmax_loss(x, weight, label, *, m, s, block_c=4096, num_class_splits=None):
    """x: (B, 192), weight: (n_class, 192) f32 or bf16, label: (B,) int -> f32 loss."""
    B, D = x.shape
    C, D2 = weight.shape
    assert D == D2

    w_itemsize = jnp.dtype(weight.dtype).itemsize
    x_itemsize = jnp.dtype(x.dtype).itemsize
    vmem_cap = _vmem_capacity_bytes()

    # Class tile: 128-lane aligned (lane-dense (B, Ct) temporaries, full-width
    # reductions), large enough that the per-tile weight DMA dominates the
    # per-grid-step overhead, and clamped so the double-buffered weight tile
    # plus per-tile f32 temporaries stay well inside VMEM on every generation.
    per_class_bytes = 2 * D * w_itemsize + 8 * D + 12 * B * 4
    c_cap = max(_LANE, (int((0.30 * vmem_cap) // per_class_bytes) // _LANE) * _LANE)
    if C <= _LANE:
        c_tile = C                              # single full-extent block
    else:
        c_tile = _round_up(min(block_c, C), _LANE)
        c_tile = min(c_tile, (C // _LANE) * _LANE)   # keep block <= array extent
        c_tile = max(_LANE, min(c_tile, c_cap))

    n_tiles = pl.cdiv(C, c_tile)

    if num_class_splits is None:
        num_class_splits = min(_tensorcores_per_device(), n_tiles)
    num_class_splits = max(1, int(num_class_splits))
    tiles_per_split = pl.cdiv(n_tiles, num_class_splits)

    need_mask = (C % c_tile != 0) or (num_class_splits * tiles_per_split != n_tiles)
    mm_dtype = jnp.bfloat16 if weight.dtype == jnp.bfloat16 else jnp.float32

    label2d = label.reshape(B, 1).astype(jnp.int32)

    kernel = functools.partial(
        _aamsoftmax_kernel,
        cos_m=math.cos(m), sin_m=math.sin(m),
        th=math.cos(math.pi - m), mm=math.sin(math.pi - m) * m,
        s=float(s), n_class=C, c_tile=c_tile,
        tiles_per_split=tiles_per_split, mm_dtype=mm_dtype, need_mask=need_mask)

    # VMEM budget derived from the actual device capacity (64 MiB on v7x,
    # 128 MiB on v5e/v6e), with headroom for Mosaic-internal scratch.
    est = (c_tile * per_class_bytes              # weight tiles + per-tile temporaries
           + B * D * (x_itemsize + 4)            # resident x + normalized-x scratch
           + 64 * 1024)
    vmem_limit = int(min(0.85 * vmem_cap, max(16 * 1024 * 1024, 2 * est)))

    last_tile = n_tiles - 1

    def x_map(sp, k):
        return (0, 0)

    def lab_map(sp, k):
        return (0, 0)

    def w_map(sp, k):
        # Clamp overflow tiles of an uneven split to a valid block (the kernel
        # masks them out via `limit <= 0`), so the DMA never goes out of bounds.
        return (jnp.minimum(sp * tiles_per_split + k, last_tile), 0)

    def out_map(sp, k):
        return (sp, 0, 0)

    grid = (num_class_splits, tiles_per_split)
    part_shape = jax.ShapeDtypeStruct((num_class_splits, B, 1), jnp.float32)

    m_part, l_part, t_part = pl.pallas_call(
        kernel,
        out_shape=(part_shape, part_shape, part_shape),
        grid_spec=pltpu.PrefetchScalarGridSpec(
            num_scalar_prefetch=0,
            grid=grid,
            in_specs=[
                pl.BlockSpec((B, D), x_map),           # x (resident)
                pl.BlockSpec((c_tile, D), w_map),      # streamed weight tile
                pl.BlockSpec((B, 1), lab_map),         # label (resident)
            ],
            out_specs=(
                pl.BlockSpec((1, B, 1), out_map),      # partial running max
                pl.BlockSpec((1, B, 1), out_map),      # partial sum-exp
                pl.BlockSpec((1, B, 1), out_map),      # partial target logit
            ),
            scratch_shapes=[
                pltpu.VMEM((B, D), jnp.float32),       # normalized x
                pltpu.VMEM((B, 1), jnp.float32),       # running max
                pltpu.VMEM((B, 1), jnp.float32),       # running sum-exp
                pltpu.VMEM((B, 1), jnp.float32),       # target logit
            ],
        ),
        compiler_params=pltpu.CompilerParams(
            dimension_semantics=("parallel", "arbitrary"),
            vmem_limit_bytes=vmem_limit,
        ),
    )(x, weight, label2d)

    # Tiny JAX epilogue: combine per-split partial logsumexps + target logits.
    m_p = m_part[:, :, 0]                       # (S, B)
    l_p = l_part[:, :, 0]
    t_p = t_part[:, :, 0]
    m_tot = jnp.max(m_p, axis=0)                # (B,)
    l_tot = jnp.sum(l_p * jnp.exp(m_p - m_tot[None, :]), axis=0)
    lse = m_tot + jnp.log(l_tot)
    t_tot = jnp.sum(t_p, axis=0)
    return jnp.mean(lse - t_tot)


if __name__ == "__main__":
    key = jax.random.PRNGKey(0)
    kx, kw, kl = jax.random.split(key, 3)

    n_class = 200          # > 128 so the class axis is actually tiled (ragged last tile)
    emb_dim = 192          # fixed by the module (weight: (n_class, 192))
    batch = 8
    m = 0.2
    s = 30.0

    # Deterministic "xavier_normal_": std = gain * sqrt(2 / (fan_in + fan_out))
    std = 1.0 * math.sqrt(2.0 / (n_class + emb_dim))
    weight = jax.random.normal(kw, (n_class, emb_dim), jnp.float32) * std
    x = jax.random.normal(kx, (batch, emb_dim), jnp.float32)
    label = jax.random.randint(kl, (batch,), 0, n_class, jnp.int32)

    # Pure-JAX reference (same math as the PyTorch module, outside Pallas).
    def ref(xv, wv, lab):
        xn = xv / jnp.maximum(jnp.linalg.norm(xv, axis=-1, keepdims=True), 1e-12)
        wn = wv / jnp.maximum(jnp.linalg.norm(wv, axis=-1, keepdims=True), 1e-12)
        cosine = xn @ wn.T
        sine = jnp.sqrt(jnp.clip(1.0 - cosine ** 2, 0.0, 1.0))
        phi = cosine * math.cos(m) - sine * math.sin(m)
        phi = jnp.where(cosine - math.cos(math.pi - m) > 0,
                        phi, cosine - math.sin(math.pi - m) * m)
        oh = jax.nn.one_hot(lab, cosine.shape[1], dtype=jnp.float32)
        logits = (oh * phi + (1 - oh) * cosine) * s
        logp = jax.nn.log_softmax(logits, axis=-1)
        return -jnp.mean(jnp.sum(oh * logp, axis=-1))

    ref_loss = ref(x, weight, label)

    # 1) f32 weights, small class tile -> 2 streamed tiles incl. ragged last tile.
    loss_f32 = aamsoftmax_loss(x, weight, label, m=m, s=s, block_c=128)
    jax.block_until_ready(loss_f32)
    assert jnp.allclose(loss_f32, ref_loss, atol=1e-4, rtol=1e-4), (loss_f32, ref_loss)

    # 2) Class axis split in two (dual-TensorCore path: partial lse + JAX combine).
    loss_split = aamsoftmax_loss(x, weight, label, m=m, s=s, block_c=128,
                                 num_class_splits=2)
    jax.block_until_ready(loss_split)
    assert jnp.allclose(loss_split, ref_loss, atol=1e-4, rtol=1e-4), (loss_split, ref_loss)

    # 3) 2 splits but only 1 class tile -> exercises the empty-split combine path.
    loss_empty = aamsoftmax_loss(x, weight, label, m=m, s=s, block_c=512,
                                 num_class_splits=2)
    jax.block_until_ready(loss_empty)
    assert jnp.allclose(loss_empty, ref_loss, atol=1e-4, rtol=1e-4), (loss_empty, ref_loss)

    # 4) bf16 weight streaming: half the weight HBM bytes, bf16 MXU matmul,
    #    f32 norms / phi / logsumexp (looser tolerance vs the f32 reference).
    loss_bf16 = aamsoftmax_loss(x, weight.astype(jnp.bfloat16), label, m=m, s=s,
                                block_c=128)
    jax.block_until_ready(loss_bf16)
    assert jnp.allclose(loss_bf16, ref_loss, atol=5e-2, rtol=2e-2), (loss_bf16, ref_loss)

    print("KERNEL_OK")
</pallas_src>

<mosaic_0001>
module attributes {stable_mosaic.version = 11 : i64} {
  func.func @_aamsoftmax_kernel(%arg0: i32, %arg1: i32, %arg2: memref<8x192xf32, #tpu.memory_space<vmem>>, %arg3: memref<128x192xf32, #tpu.memory_space<vmem>>, %arg4: memref<8x1xi32, #tpu.memory_space<vmem>>, %arg5: memref<1x8x1xf32, #tpu.memory_space<vmem>>, %arg6: memref<1x8x1xf32, #tpu.memory_space<vmem>>, %arg7: memref<1x8x1xf32, #tpu.memory_space<vmem>>, %arg8: memref<8x192xf32, #tpu.memory_space<vmem>>, %arg9: memref<8x1xf32, #tpu.memory_space<vmem>>, %arg10: memref<8x1xf32, #tpu.memory_space<vmem>>, %arg11: memref<8x1xf32, #tpu.memory_space<vmem>>) attributes {dimension_semantics = [#tpu.dimension_semantics<parallel>, #tpu.dimension_semantics<arbitrary>], iteration_bounds = array<i64: 1, 2>, scalar_prefetch = 0 : i64, scratch_operands = 4 : i64, tpu.core_type = #tpu.core_type<tc>, window_params = [{pipeline_mode = #tpu.pipeline_mode<synchronous>, transform_indices = @transform_0, window_bounds = array<i64: 8, 192>}, {transform_indices = @transform_1, window_bounds = array<i64: 128, 192>}, {pipeline_mode = #tpu.pipeline_mode<synchronous>, transform_indices = @transform_2, window_bounds = array<i64: 8, 1>}, {transform_indices = @transform_3, window_bounds = array<i64: 1, 8, 1>}, {transform_indices = @transform_4, window_bounds = array<i64: 1, 8, 1>}, {transform_indices = @transform_5, window_bounds = array<i64: 1, 8, 1>}]} {
    %c2_i32 = arith.constant 2 : i32
    %0 = arith.muli %arg0, %c2_i32 : i32
    %1 = arith.addi %0, %arg1 : i32
    %c0_i32 = arith.constant 0 : i32
    %2 = arith.cmpi eq, %arg1, %c0_i32 : i32
    %3 = arith.extui %2 : i1 to i32
    %c0_i32_0 = arith.constant 0 : i32
    %4 = arith.cmpi ne, %3, %c0_i32_0 : i32
    scf.if %4 {
      %c0_38 = arith.constant 0 : index
      %c0_39 = arith.constant 0 : index
      %80 = vector.load %arg2[%c0_38, %c0_39] : memref<8x192xf32, #tpu.memory_space<vmem>>, vector<8x192xf32>
      %81 = arith.mulf %80, %80 : vector<8x192xf32>
      %cst_40 = arith.constant dense<0.000000e+00> : vector<8xf32>
      %82 = vector.multi_reduction <add>, %81, %cst_40 [1] : vector<8x192xf32> to vector<8xf32>
      %83 = vector.shape_cast %82 : vector<8xf32> to vector<8x1xf32>
      %cst_41 = arith.constant 1.000000e-24 : f32
      %84 = vector.broadcast %cst_41 : f32 to vector<8x1xf32>
      %85 = arith.maximumf %83, %84 : vector<8x1xf32>
      %86 = math.rsqrt %85 : vector<8x1xf32>
      %87 = vector.broadcast %86 : vector<8x1xf32> to vector<8x192xf32>
      %88 = arith.mulf %80, %87 : vector<8x192xf32>
      %c0_42 = arith.constant 0 : index
      %c0_43 = arith.constant 0 : index
      %89 = vector.load %arg8[%c0_42, %c0_43] : memref<8x192xf32, #tpu.memory_space<vmem>>, vector<8x192xf32>
      tpu.vector_store %arg8[%c0_42, %c0_43], %88 {strides = array<i32>} : memref<8x192xf32, #tpu.memory_space<vmem>>, vector<8x192xf32>,
      %cst_44 = arith.constant -1.000000e+30 : f32
      %90 = vector.broadcast %cst_44 : f32 to vector<8x1xf32>
      %c0_45 = arith.constant 0 : index
      %c0_46 = arith.constant 0 : index
      %91 = vector.load %arg9[%c0_45, %c0_46] : memref<8x1xf32, #tpu.memory_space<vmem>>, vector<8x1xf32>
      tpu.vector_store %arg9[%c0_45, %c0_46], %90 {strides = array<i32>} : memref<8x1xf32, #tpu.memory_space<vmem>>, vector<8x1xf32>,
      %cst_47 = arith.constant 0.000000e+00 : f32
      %92 = vector.broadcast %cst_47 : f32 to vector<8x1xf32>
      %c0_48 = arith.constant 0 : index
      %c0_49 = arith.constant 0 : index
      %93 = vector.load %arg10[%c0_48, %c0_49] : memref<8x1xf32, #tpu.memory_space<vmem>>, vector<8x1xf32>
      tpu.vector_store %arg10[%c0_48, %c0_49], %92 {strides = array<i32>} : memref<8x1xf32, #tpu.memory_space<vmem>>, vector<8x1xf32>,
      %cst_50 = arith.constant 0.000000e+00 : f32
      %94 = vector.broadcast %cst_50 : f32 to vector<8x1xf32>
      %c0_51 = arith.constant 0 : index
      %c0_52 = arith.constant 0 : index
      %95 = vector.load %arg11[%c0_51, %c0_52] : memref<8x1xf32, #tpu.memory_space<vmem>>, vector<8x1xf32>
      tpu.vector_store %arg11[%c0_51, %c0_52], %94 {strides = array<i32>} : memref<8x1xf32, #tpu.memory_space<vmem>>, vector<8x1xf32>,
    } else {
    }
    %c0 = arith.constant 0 : index
    %c0_1 = arith.constant 0 : index
    %5 = vector.load %arg3[%c0, %c0_1] : memref<128x192xf32, #tpu.memory_space<vmem>>, vector<128x192xf32>
    %cst = arith.constant 1.000000e+00 : f32
    %6 = vector.broadcast %cst : f32 to vector<1x192xf32>
    %7 = arith.mulf %5, %5 : vector<128x192xf32>
    %cst_2 = arith.constant dense<0.000000e+00> : vector<1x128xf32>
    %8 = tpu.matmul %6, %7, %cst_2 {dimension_numbers = #tpu.dot_dimension_numbers<[1], [1], [0], [0], [0, 0, 1, 0], [], []>} : vector<1x192xf32>, vector<128x192xf32>, vector<1x128xf32> -> vector<1x128xf32>
    %cst_3 = arith.constant 1.000000e-24 : f32
    %9 = vector.broadcast %cst_3 : f32 to vector<1x128xf32>
    %10 = arith.maximumf %8, %9 : vector<1x128xf32>
    %11 = math.rsqrt %10 : vector<1x128xf32>
    %c0_4 = arith.constant 0 : index
    %c0_5 = arith.constant 0 : index
    %12 = vector.load %arg8[%c0_4, %c0_5] : memref<8x192xf32, #tpu.memory_space<vmem>>, vector<8x192xf32>
    %cst_6 = arith.constant dense<0.000000e+00> : vector<8x128xf32>
    %13 = tpu.matmul %12, %5, %cst_6 {dimension_numbers = #tpu.dot_dimension_numbers<[1], [1], [0], [0], [0, 0, 1, 0], [], []>} : vector<8x192xf32>, vector<128x192xf32>, vector<8x128xf32> -> vector<8x128xf32>
    %14 = vector.broadcast %11 : vector<1x128xf32> to vector<8x128xf32>
    %15 = arith.mulf %13, %14 : vector<8x128xf32>
    %16 = arith.mulf %15, %15 : vector<8x128xf32>
    %cst_7 = arith.constant 1.000000e+00 : f32
    %17 = vector.broadcast %cst_7 : f32 to vector<8x128xf32>
    %18 = arith.subf %17, %16 : vector<8x128xf32>
    %cst_8 = arith.constant 0.000000e+00 : f32
    %cst_9 = arith.constant 1.000000e+00 : f32
    %19 = vector.broadcast %cst_8 : f32 to vector<8x128xf32>
    %20 = arith.maximumf %19, %18 : vector<8x128xf32>
    %21 = vector.broadcast %cst_9 : f32 to vector<8x128xf32>
    %22 = arith.minimumf %21, %20 : vector<8x128xf32>
    %23 = math.sqrt %22 : vector<8x128xf32>
    %cst_10 = arith.constant 0.980066597 : f32
    %24 = vector.broadcast %cst_10 : f32 to vector<8x128xf32>
    %25 = arith.mulf %15, %24 : vector<8x128xf32>
    %cst_11 = arith.constant 0.198669329 : f32
    %26 = vector.broadcast %cst_11 : f32 to vector<8x128xf32>
    %27 = arith.mulf %23, %26 : vector<8x128xf32>
    %28 = arith.subf %25, %27 : vector<8x128xf32>
    %cst_12 = arith.constant -0.980066597 : f32
    %29 = vector.broadcast %cst_12 : f32 to vector<8x128xf32>
    %30 = arith.subf %15, %29 : vector<8x128xf32>
    %cst_13 = arith.constant 0.000000e+00 : f32
    %31 = vector.broadcast %cst_13 : f32 to vector<8x128xf32>
    %32 = arith.cmpf ogt, %30, %31 : vector<8x128xf32>
    %cst_14 = arith.constant 0.0397338644 : f32
    %33 = vector.broadcast %cst_14 : f32 to vector<8x128xf32>
    %34 = arith.subf %15, %33 : vector<8x128xf32>
    %35 = arith.select %32, %28, %34 : vector<8x128xi1>, vector<8x128xf32>
    %36 = tpu.iota {dimensions = array<i32: 1>} : vector<8x128xi32>
    %c0_15 = arith.constant 0 : index
    %c0_16 = arith.constant 0 : index
    %37 = vector.load %arg4[%c0_15, %c0_16] : memref<8x1xi32, #tpu.memory_space<vmem>>, vector<8x1xi32>
    %c128_i32 = arith.constant 128 : i32
    %38 = arith.muli %1, %c128_i32 : i32
    %39 = vector.broadcast %38 : i32 to vector<8x1xi32>
    %40 = arith.subi %37, %39 : vector<8x1xi32>
    %41 = vector.broadcast %40 : vector<8x1xi32> to vector<8x128xi32>
    %42 = arith.cmpi eq, %36, %41 : vector<8x128xi32>
    %43 = arith.select %42, %35, %15 : vector<8x128xi1>, vector<8x128xf32>
    %cst_17 = arith.constant 3.000000e+01 : f32
    %44 = vector.broadcast %cst_17 : f32 to vector<8x128xf32>
    %45 = arith.mulf %43, %44 : vector<8x128xf32>
    %c128_i32_18 = arith.constant 128 : i32
    %46 = arith.muli %1, %c128_i32_18 : i32
    %c200_i32 = arith.constant 200 : i32
    %47 = arith.subi %c200_i32, %46 : i32
    %48 = vector.broadcast %47 : i32 to vector<8x128xi32>
    %49 = arith.cmpi slt, %36, %48 : vector<8x128xi32>
    %cst_19 = arith.constant -1.000000e+30 : f32
    %50 = vector.broadcast %cst_19 : f32 to vector<8x128xf32>
    %51 = arith.select %49, %45, %50 : vector<8x128xi1>, vector<8x128xf32>
    %c0_20 = arith.constant 0 : index
    %c0_21 = arith.constant 0 : index
    %52 = vector.load %arg11[%c0_20, %c0_21] : memref<8x1xf32, #tpu.memory_space<vmem>>, vector<8x1xf32>
    %cst_22 = arith.constant 0.000000e+00 : f32
    %53 = vector.broadcast %cst_22 : f32 to vector<8x128xf32>
    %54 = arith.select %42, %35, %53 : vector<8x128xi1>, vector<8x128xf32>
    %cst_23 = arith.constant dense<0.000000e+00> : vector<8xf32>
    %55 = vector.multi_reduction <add>, %54, %cst_23 [1] : vector<8x128xf32> to vector<8xf32>
    %56 = vector.shape_cast %55 : vector<8xf32> to vector<8x1xf32>
    %cst_24 = arith.constant 3.000000e+01 : f32
    %57 = vector.broadcast %cst_24 : f32 to vector<8x1xf32>
    %58 = arith.mulf %56, %57 : vector<8x1xf32>
    %59 = arith.addf %52, %58 : vector<8x1xf32>
    %c0_25 = arith.constant 0 : index
    %c0_26 = arith.constant 0 : index
    %60 = vector.load %arg11[%c0_25, %c0_26] : memref<8x1xf32, #tpu.memory_space<vmem>>, vector<8x1xf32>
    tpu.vector_store %arg11[%c0_25, %c0_26], %59 {strides = array<i32>} : memref<8x1xf32, #tpu.memory_space<vmem>>, vector<8x1xf32>,
    %c0_27 = arith.constant 0 : index
    %c0_28 = arith.constant 0 : index
    %61 = vector.load %arg9[%c0_27, %c0_28] : memref<8x1xf32, #tpu.memory_space<vmem>>, vector<8x1xf32>
    %cst_29 = arith.constant dense<0xFF800000> : vector<8xf32>
    %62 = vector.multi_reduction <maximumf>, %51, %cst_29 [1] : vector<8x128xf32> to vector<8xf32>
    %63 = vector.shape_cast %62 : vector<8xf32> to vector<8x1xf32>
    %64 = arith.maximumf %61, %63 : vector<8x1xf32>
    %c0_30 = arith.constant 0 : index
    %c0_31 = arith.constant 0 : index
    %65 = vector.load %arg10[%c0_30, %c0_31] : memref<8x1xf32, #tpu.memory_space<vmem>>, vector<8x1xf32>
    %66 = arith.subf %61, %64 : vector<8x1xf32>
    %67 = math.exp %66 : vector<8x1xf32>
    %68 = arith.mulf %65, %67 : vector<8x1xf32>
    %69 = vector.broadcast %64 : vector<8x1xf32> to vector<8x128xf32>
    %70 = arith.subf %51, %69 : vector<8x128xf32>
    %71 = math.exp %70 : vector<8x128xf32>
    %cst_32 = arith.constant dense<0.000000e+00> : vector<8xf32>
    %72 = vector.multi_reduction <add>, %71, %cst_32 [1] : vector<8x128xf32> to vector<8xf32>
    %73 = vector.shape_cast %72 : vector<8xf32> to vector<8x1xf32>
    %74 = arith.addf %68, %73 : vector<8x1xf32>
    %c0_33 = arith.constant 0 : index
    %c0_34 = arith.constant 0 : index
    %75 = vector.load %arg10[%c0_33, %c0_34] : memref<8x1xf32, #tpu.memory_space<vmem>>, vector<8x1xf32>
    tpu.vector_store %arg10[%c0_33, %c0_34], %74 {strides = array<i32>} : memref<8x1xf32, #tpu.memory_space<vmem>>, vector<8x1xf32>,
    %c0_35 = arith.constant 0 : index
    %c0_36 = arith.constant 0 : index
    %76 = vector.load %arg9[%c0_35, %c0_36] : memref<8x1xf32, #tpu.memory_space<vmem>>, vector<8x1xf32>
    tpu.vector_store %arg9[%c0_35, %c0_36], %64 {strides = array<i32>} : memref<8x1xf32, #tpu.memory_space<vmem>>, vector<8x1xf32>,
    %c1_i32 = arith.constant 1 : i32
    %77 = arith.cmpi eq, %arg1, %c1_i32 : i32
    %78 = arith.extui %77 : i1 to i32
    %c0_i32_37 = arith.constant 0 : i32
    %79 = arith.cmpi ne, %78, %c0_i32_37 : i32
    scf.if %79 {
      %c0_38 = arith.constant 0 : index
      %c0_39 = arith.constant 0 : index
      %80 = vector.load %arg9[%c0_38, %c0_39] : memref<8x1xf32, #tpu.memory_space<vmem>>, vector<8x1xf32>
      %81 = vector.shape_cast %80 : vector<8x1xf32> to vector<1x8x1xf32>
      %c0_40 = arith.constant 0 : index
      %c0_41 = arith.constant 0 : index
      %c0_42 = arith.constant 0 : index
      %82 = vector.load %arg5[%c0_40, %c0_41, %c0_42] : memref<1x8x1xf32, #tpu.memory_space<vmem>>, vector<1x8x1xf32>
      tpu.vector_store %arg5[%c0_40, %c0_41, %c0_42], %81 {strides = array<i32>} : memref<1x8x1xf32, #tpu.memory_space<vmem>>, vector<1x8x1xf32>,
      %c0_43 = arith.constant 0 : index
      %c0_44 = arith.constant 0 : index
      %83 = vector.load %arg10[%c0_43, %c0_44] : memref<8x1xf32, #tpu.memory_space<vmem>>, vector<8x1xf32>
      %84 = vector.shape_cast %83 : vector<8x1xf32> to vector<1x8x1xf32>
      %c0_45 = arith.constant 0 : index
      %c0_46 = arith.constant 0 : index
      %c0_47 = arith.constant 0 : index
      %85 = vector.load %arg6[%c0_45, %c0_46, %c0_47] : memref<1x8x1xf32, #tpu.memory_space<vmem>>, vector<1x8x1xf32>
      tpu.vector_store %arg6[%c0_45, %c0_46, %c0_47], %84 {strides = array<i32>} : memref<1x8x1xf32, #tpu.memory_space<vmem>>, vector<1x8x1xf32>,
      %c0_48 = arith.constant 0 : index
      %c0_49 = arith.constant 0 : index
      %86 = vector.load %arg11[%c0_48, %c0_49] : memref<8x1xf32, #tpu.memory_space<vmem>>, vector<8x1xf32>
      %87 = vector.shape_cast %86 : vector<8x1xf32> to vector<1x8x1xf32>
      %c0_50 = arith.constant 0 : index
      %c0_51 = arith.constant 0 : index
      %c0_52 = arith.constant 0 : index
      %88 = vector.load %arg7[%c0_50, %c0_51, %c0_52] : memref<1x8x1xf32, #tpu.memory_space<vmem>>, vector<1x8x1xf32>
      tpu.vector_store %arg7[%c0_50, %c0_51, %c0_52], %87 {strides = array<i32>} : memref<1x8x1xf32, #tpu.memory_space<vmem>>, vector<1x8x1xf32>,
    } else {
    }
    return
  }
  func.func @transform_0(%arg0: i32, %arg1: i32) -> (i32, i32) {
    %c0_i32 = arith.constant 0 : i32
    %c0_i32_0 = arith.constant 0 : i32
    %c0_i32_1 = arith.constant 0 : i32
    return %c0_i32, %c0_i32_0 : i32, i32
  }
  func.func @transform_1(%arg0: i32, %arg1: i32) -> (i32, i32) {
    %c2_i32 = arith.constant 2 : i32
    %0 = arith.muli %arg0, %c2_i32 : i32
    %1 = arith.addi %0, %arg1 : i32
    %c1_i32 = arith.constant 1 : i32
    %2 = arith.minsi %1, %c1_i32 : i32
    %c0_i32 = arith.constant 0 : i32
    %c0_i32_0 = arith.constant 0 : i32
    return %2, %c0_i32 : i32, i32
  }
  func.func @transform_2(%arg0: i32, %arg1: i32) -> (i32, i32) {
    %c0_i32 = arith.constant 0 : i32
    %c0_i32_0 = arith.constant 0 : i32
    %c0_i32_1 = arith.constant 0 : i32
    return %c0_i32, %c0_i32_0 : i32, i32
  }
  func.func @transform_3(%arg0: i32, %arg1: i32) -> (i32, i32, i32) {
    %c0_i32 = arith.constant 0 : i32
    %c0_i32_0 = arith.constant 0 : i32
    %c0_i32_1 = arith.constant 0 : i32
    return %arg0, %c0_i32, %c0_i32_0 : i32, i32, i32
  }
  func.func @transform_4(%arg0: i32, %arg1: i32) -> (i32, i32, i32) {
    %c0_i32 = arith.constant 0 : i32
    %c0_i32_0 = arith.constant 0 : i32
    %c0_i32_1 = arith.constant 0 : i32
    return %arg0, %c0_i32, %c0_i32_0 : i32, i32, i32
  }
  func.func @transform_5(%arg0: i32, %arg1: i32) -> (i32, i32, i32) {
    %c0_i32 = arith.constant 0 : i32
    %c0_i32_0 = arith.constant 0 : i32
    %c0_i32_1 = arith.constant 0 : i32
    return %arg0, %c0_i32, %c0_i32_0 : i32, i32, i32
  }
}

</mosaic_0001>

<llo_original>
// kernel: tpu_custom_call.1
$region0: #{tpu_custom_call.1}
  #allocation0 [shape = 'u32[]', space=smem, size = 0x4, offset = 0x4, fixed_abs, tag = 'smem constant byte address 0x4 - core index']
  #allocation1 [shape = 'u32[144,128]{1,0:T(1,128)}', space=vmem, size = 0x12000, scoped, tag = 'internal scratch']
  #allocation2 [shape = 'f32[8,192]{1,0:T(8,128)}', space=vmem, size = 0x2000, scoped, tag = 'scratch operand']
  #allocation3 [shape = 'f32[8,1]{1,0:T(8,128)}', space=vmem, size = 0x1000, scoped, tag = 'scratch operand']
  #allocation4 [shape = 'f32[8,1]{1,0:T(8,128)}', space=vmem, size = 0x1000, scoped, tag = 'scratch operand']
  #allocation5 [shape = 'f32[8,1]{1,0:T(8,128)}', space=vmem, size = 0x1000, scoped, tag = 'scratch operand']
  %s0 = inlined_call_operand.vmem [shape: f32[8,192], index: 0, kind: input, shape index: {}]
  %s1 = inlined_call_operand.vmem [shape: f32[200,192], index: 1, kind: input, shape index: {}]
  %s2 = inlined_call_operand.vmem [shape: s32[8,1], index: 2, kind: input, shape index: {}]
  %s3 = inlined_call_operand.vmem [shape: f32[1,8,1], index: 3, kind: output, shape index: {0}]
  %s4 = inlined_call_operand.vmem [shape: f32[1,8,1], index: 4, kind: output, shape index: {1}]
  %s5 = inlined_call_operand.vmem [shape: f32[1,8,1], index: 5, kind: output, shape index: {2}]
  %6 = xla_tuple %s3, %s4, %s5
  %s7 = sld [smem:[#allocation0]]
  $region69: #{tpu_custom_call.1} parent=0
    _
  %s9 = ssub.s32 1, %s7
  %s10 = scalar_select 0, %s9, %s7
  loop: start=0, step=1, limit=4
  $region2: #{tpu_custom_call.1} parent=0 // loop_pre_header
    _
  $region3: #{tpu_custom_call.1} parent=0 // loop_header
    %s12 = sphi 0, %s16
    %p13 = scmp.ge.s32.totalorder %s12, 4
    %s19 = sphi 0, %s31
    %s20 = sphi 0, %s27
    %s21 = sphi 0, %s19
    %s22 = sphi 0, %s20
    %s23 = sphi 0, %s21
    %s24 = sphi 0, %s22
    %s32 = sphi 0, %s32
    %s34 = sphi 0, %s32
    %s35 = sphi 0, %s34
    %s49 = sphi 0, %s35
    %s63 = sphi 0, %s65
    %s66 = sphi 0, %s63
    %s67 = sphi 0, %s66
    %s83 = sphi 0, %s67
    %s87 = sphi 0, %s87
    %s89 = sphi 0, %s87
    %s90 = sphi 0, %s89
    %s104 = sphi 0, %s90
    %s110 = sphi 0, %s112
    %s113 = sphi 0, %s110
    %s114 = sphi 0, %s113
    %s130 = sphi 0, %s114
    %s136 = sphi 0, %s138
    %s139 = sphi 0, %s136
    %s140 = sphi 0, %s139
    %s156 = sphi 0, %s140
    %s162 = sphi 0, %s164
    %s165 = sphi 0, %s162
    %s166 = sphi 0, %s165
    %s182 = sphi 0, %s166
  $region4: #{tpu_custom_call.1} parent=0 // loop_header_branch
    %15 = sbr.rel (%p13) target = $region8
  $region5: #{tpu_custom_call.1} parent=0 // loop_body
    %s17 = ssub.s32 %s12, 1
    %s18 = ssub.s32 %s12, 2
    %s25 = sadd.s32 1, %s20
    %p26 = scmp.ge.s32.totalorder %s25, 2
    %s27 = scalar_select %p26, 0, %s25
    %s28 = sadd.s32 1, %s19
    %s29 = scalar_select %p26, %s28, %s19
    %p30 = scmp.ge.s32.totalorder %s29, 1
    %s31 = scalar_select %p30, 0, %s29
    %s33 = sadd.s32 %s32, 1
    %p36 = scmp.eq.s32.totalorder %s12, 1
    %p37 = scmp.ne.s32.totalorder %s32, %s34
    %p38 = scmp.eq.s32.totalorder %s12, 0
    %p39 = por %p37, %p38
    %p40 = scmp.ne.s32.totalorder %s32, %s34
    %p41 = scmp.eq.s32.totalorder %s17, 1
    %p42 = por %p40, %p41
    %p43 = scmp.ne.s32.totalorder %s34, %s35
    %p44 = scmp.eq.s32.totalorder %s17, 0
    %p45 = por %p43, %p44
    %p46 = scmp.ne.s32.totalorder %s34, %s35
    %p47 = scmp.eq.s32.totalorder %s18, 1
    %p48 = por %p46, %p47
    %p50 = scmp.ne.s32.totalorder %s35, %s49
    %p51 = scmp.eq.s32.totalorder %s18, 0
    %p52 = por %p50, %p51
    %s53 = smul.u32 %s19, 2
    %s54 = sadd.s32 %s53, %s20
    %p55 = scmp.lt.s32.totalorder %s54, 1
    %s56 = scalar_select %p55, %s54, 1
    %s57 = smul.u32 %s31, 2
    %s58 = sadd.s32 %s57, %s27
    %p59 = scmp.lt.s32.totalorder %s58, 1
    %s60 = scalar_select %p59, %s58, 1
    %s61 = ssub.s32 %s56, %s60
    %p62 = scmp.eq.s32.totalorder %s61, 0
    %s64 = sadd.s32 %s63, 1
    %s65 = scalar_select %p62, %s63, %s64
    %p68 = pneg %p62
    %p69 = scmp.eq.s32.totalorder %s12, 1
    %p70 = por %p68, %p69
    %p71 = scmp.ne.s32.totalorder %s63, %s66
    %p72 = scmp.eq.s32.totalorder %s12, 0
    %p73 = por %p71, %p72
    %p74 = scmp.ne.s32.totalorder %s63, %s66
    %p75 = scmp.eq.s32.totalorder %s17, 1
    %p76 = por %p74, %p75
    %p77 = scmp.ne.s32.totalorder %s66, %s67
    %p78 = scmp.eq.s32.totalorder %s17, 0
    %p79 = por %p77, %p78
    %p80 = scmp.ne.s32.totalorder %s66, %s67
    %p81 = scmp.eq.s32.totalorder %s18, 1
    %p82 = por %p80, %p81
    %p84 = scmp.ne.s32.totalorder %s67, %s83
    %p85 = scmp.eq.s32.totalorder %s18, 0
    %p86 = por %p84, %p85
    %s88 = sadd.s32 %s87, 1
    %p91 = scmp.eq.s32.totalorder %s12, 1
    %p92 = scmp.ne.s32.totalorder %s87, %s89
    %p93 = scmp.eq.s32.totalorder %s12, 0
    %p94 = por %p92, %p93
    %p95 = scmp.ne.s32.totalorder %s87, %s89
    %p96 = scmp.eq.s32.totalorder %s17, 1
    %p97 = por %p95, %p96
    %p98 = scmp.ne.s32.totalorder %s89, %s90
    %p99 = scmp.eq.s32.totalorder %s17, 0
    %p100 = por %p98, %p99
    %p101 = scmp.ne.s32.totalorder %s89, %s90
    %p102 = scmp.eq.s32.totalorder %s18, 1
    %p103 = por %p101, %p102
    %p105 = scmp.ne.s32.totalorder %s90, %s104
    %p106 = scmp.eq.s32.totalorder %s18, 0
    %p107 = por %p105, %p106
    %s108 = ssub.s32 %s19, %s31
    %p109 = scmp.eq.s32.totalorder %s108, 0
    %s111 = sadd.s32 %s110, 1
    %s112 = scalar_select %p109, %s110, %s111
    %p115 = pneg %p109
    %p116 = scmp.eq.s32.totalorder %s12, 1
    %p117 = por %p115, %p116
    %p118 = scmp.ne.s32.totalorder %s110, %s113
    %p119 = scmp.eq.s32.totalorder %s12, 0
    %p120 = por %p118, %p119
    %p121 = scmp.ne.s32.totalorder %s110, %s113
    %p122 = scmp.eq.s32.totalorder %s17, 1
    %p123 = por %p121, %p122
    %p124 = scmp.ne.s32.totalorder %s113, %s114
    %p125 = scmp.eq.s32.totalorder %s17, 0
    %p126 = por %p124, %p125
    %p127 = scmp.ne.s32.totalorder %s113, %s114
    %p128 = scmp.eq.s32.totalorder %s18, 1
    %p129 = por %p127, %p128
    %p131 = scmp.ne.s32.totalorder %s114, %s130
    %p132 = scmp.eq.s32.totalorder %s18, 0
    %p133 = por %p131, %p132
    %s134 = ssub.s32 %s19, %s31
    %p135 = scmp.eq.s32.totalorder %s134, 0
    %s137 = sadd.s32 %s136, 1
    %s138 = scalar_select %p135, %s136, %s137
    %p141 = pneg %p135
    %p142 = scmp.eq.s32.totalorder %s12, 1
    %p143 = por %p141, %p142
    %p144 = scmp.ne.s32.totalorder %s136, %s139
    %p145 = scmp.eq.s32.totalorder %s12, 0
    %p146 = por %p144, %p145
    %p147 = scmp.ne.s32.totalorder %s136, %s139
    %p148 = scmp.eq.s32.totalorder %s17, 1
    %p149 = por %p147, %p148
    %p150 = scmp.ne.s32.totalorder %s139, %s140
    %p151 = scmp.eq.s32.totalorder %s17, 0
    %p152 = por %p150, %p151
    %p153 = scmp.ne.s32.totalorder %s139, %s140
    %p154 = scmp.eq.s32.totalorder %s18, 1
    %p155 = por %p153, %p154
    %p157 = scmp.ne.s32.totalorder %s140, %s156
    %p158 = scmp.eq.s32.totalorder %s18, 0
    %p159 = por %p157, %p158
    %s160 = ssub.s32 %s19, %s31
    %p161 = scmp.eq.s32.totalorder %s160, 0
    %s163 = sadd.s32 %s162, 1
    %s164 = scalar_select %p161, %s162, %s163
    %p167 = pneg %p161
    %p168 = scmp.eq.s32.totalorder %s12, 1
    %p169 = por %p167, %p168
    %p170 = scmp.ne.s32.totalorder %s162, %s165
    %p171 = scmp.eq.s32.totalorder %s12, 0
    %p172 = por %p170, %p171
    %p173 = scmp.ne.s32.totalorder %s162, %s165
    %p174 = scmp.eq.s32.totalorder %s17, 1
    %p175 = por %p173, %p174
    %p176 = scmp.ne.s32.totalorder %s165, %s166
    %p177 = scmp.eq.s32.totalorder %s17, 0
    %p178 = por %p176, %p177
    %p179 = scmp.ne.s32.totalorder %s165, %s166
    %p180 = scmp.eq.s32.totalorder %s18, 1
    %p181 = por %p179, %p180
    %p183 = scmp.ne.s32.totalorder %s166, %s182
    %p184 = scmp.eq.s32.totalorder %s18, 0
    %p185 = por %p183, %p184
    %p186 = scmp.le.s32.totalorder 1, %s12
    %p187 = scmp.lt.s32.totalorder %s12, 3
    %p188 = pnand %p186, %p187
    %p189 = pneg %p188
    // Predicated region
    $region9: #{tpu_custom_call.1} parent=5 // pred_check
      _
    $region10: #{tpu_custom_call.1} parent=5 // pred_check_branch
      %191 = sbr.rel (%p188) target = $region12
    $region11: #{tpu_custom_call.1} parent=5 // pred_region
      %s192 = ssub.s32 %s12, 1
      // Predicated region
      $region13: #{tpu_custom_call.1} parent=11 // pred_check
        %p193 = pneg %p45
      $region14: #{tpu_custom_call.1} parent=11 // pred_check_branch
        %195 = sbr.rel (%p193) target = $region16
      $region15: #{tpu_custom_call.1} parent=11 // pred_region
        _
      $region16: #{tpu_custom_call.1} parent=11 // pred_fallthru
        _
      // Predicated region
      $region17: #{tpu_custom_call.1} parent=11 // pred_check
        %p196 = pneg %p100
      $region18: #{tpu_custom_call.1} parent=11 // pred_check_branch
        %198 = sbr.rel (%p196) target = $region20
      $region19: #{tpu_custom_call.1} parent=11 // pred_region
        _
      $region20: #{tpu_custom_call.1} parent=11 // pred_fallthru
        _
    $region12: #{tpu_custom_call.1} parent=5 // pred_fallthru
      _
    %p199 = scmp.lt.s32.totalorder %s12, 2
    // Predicated region
    $region21: #{tpu_custom_call.1} parent=5 // pred_check
      %p200 = pneg %p199
    $region22: #{tpu_custom_call.1} parent=5 // pred_check_branch
      %202 = sbr.rel (%p200) target = $region24
    $region23: #{tpu_custom_call.1} parent=5 // pred_region
      // Predicated region
      $region25: #{tpu_custom_call.1} parent=23 // pred_check
        %p203 = pneg %p73
      $region26: #{tpu_custom_call.1} parent=23 // pred_check_branch
        %205 = sbr.rel (%p203) target = $region28
      $region27: #{tpu_custom_call.1} parent=23 // pred_region
        %s206 = smul.u32 %s19, 2
        %s207 = sadd.s32 %s206, %s20
        %p208 = scmp.lt.s32.totalorder %s207, 1
        %s209 = scalar_select %p208, %s207, 1
        %s210 = smul.u32 16, %s209
        %s211 = ssub.s32 25, %s210
        %p212 = scmp.lt.s32.totalorder %s211, 16
        %s213 = scalar_select %p212, %s211, 16
        %s214 = smul.u32 128, %s213
        %s215 = smul.u32 %s214, 2
        %p216 = scmp.lt.s32.totalorder %s210, 24
        %s217 = scalar_select %p216, %s210, 24
        %s218 = smul.addr %s217, 2
        %s219 = smul.addr %s218, 8
        %s220 = scalar_lea.vmem %s1, %s219
        %s221 = smul.u32 %s19, 2
        %s222 = sadd.s32 %s221, %s20
        %p223 = scmp.lt.s32.totalorder %s222, 1
        %s224 = scalar_select %p223, %s222, 1
        %s225 = smul.u32 16, %s224
        %s226 = ssub.s32 25, %s225
        %p227 = scmp.lt.s32.totalorder %s226, 16
        %s228 = scalar_select %p227, %s226, 16
        %s229 = smul.u32 128, %s228
        %s230 = smul.u32 %s229, 2
      $region28: #{tpu_custom_call.1} parent=23 // pred_fallthru
        _
    $region24: #{tpu_custom_call.1} parent=5 // pred_fallthru
      _
    %p231 = scmp.le.s32.totalorder 1, %s12
    %p232 = scmp.lt.s32.totalorder %s12, 3
    %p233 = pnand %p231, %p232
    %p234 = pneg %p233
    // Predicated region
    $region29: #{tpu_custom_call.1} parent=5 // pred_check
      _
    $region30: #{tpu_custom_call.1} parent=5 // pred_check_branch
      %236 = sbr.rel (%p233) target = $region32
    $region31: #{tpu_custom_call.1} parent=5 // pred_region
      %s237 = ssub.s32 %s12, 1
      %p238 = pneg %p45
      %p239 = pneg %p42
      %s240 = smul.u32 %s21, 2
      %s241 = sadd.s32 %s240, %s22
      %p242 = scmp.lt.s32.totalorder %s241, 1
      %s243 = scalar_select %p242, %s241, 1
      %s244 = smul.u32 16, %s243
      %s245 = ssub.s32 25, %s244
      %p246 = scmp.lt.s32.totalorder %s245, 16
      %s247 = scalar_select %p246, %s245, 16
      %s248 = smul.u32 128, %s247
      %s249 = smul.u32 %s248, 2
      %p250 = scmp.lt.s32.totalorder %s244, 24
      %s251 = scalar_select %p250, %s244, 24
      %s252 = smul.addr %s251, 2
      %s253 = smul.addr %s252, 8
      %s254 = scalar_lea.vmem %s1, %s253
      %p255 = pneg %p79
      %p256 = pneg %p76
      %p257 = pneg %p100
      %p258 = pneg %p97
      %p259 = pneg %p126
      %p260 = pneg %p123
      %p261 = scmp.lt.s32.totalorder %s21, 0
      %s262 = scalar_select %p261, %s21, 0
      %s263 = smul.addr %s262, 8
      %s264 = scalar_lea.vmem %s3, %s263
      %p265 = pneg %p152
      %p266 = pneg %p149
      %p267 = scmp.lt.s32.totalorder %s21, 0
      %s268 = scalar_select %p267, %s21, 0
      %s269 = smul.addr %s268, 8
      %s270 = scalar_lea.vmem %s4, %s269
      %p271 = pneg %p178
      %p272 = pneg %p175
      %p273 = scmp.lt.s32.totalorder %s21, 0
      %s274 = scalar_select %p273, %s21, 0
      %s275 = smul.addr %s274, 8
      %s276 = scalar_lea.vmem %s5, %s275
      %s277 = smul.u32 %s21, 2
      %s278 = sadd.s32 %s277, %s22
      %p279 = scmp.lt.s32.totalorder %s278, 1
      %s280 = scalar_select %p279, %s278, 1
      %s281 = smul.u32 16, %s280
      %s282 = ssub.s32 25, %s281
      %p283 = scmp.lt.s32.totalorder %s282, 16
      %s284 = scalar_select %p283, %s282, 16
      %s285 = smul.u32 128, %s284
      %s286 = smul.u32 %s285, 2
      %p287 = scmp.lt.s32.totalorder %s281, 24
      %s288 = scalar_select %p287, %s281, 24
      %s289 = smul.addr %s288, 2
      %s290 = smul.addr %s289, 8
      %s291 = scalar_lea.vmem %s1, %s290
      %s292 = smul.u32 %s21, 2
      %s293 = sadd.s32 %s292, %s22
      %p294 = scmp.lt.s32.totalorder %s293, 1
      %s295 = scalar_select %p294, %s293, 1
      %s296 = smul.u32 16, %s295
      %s297 = ssub.s32 25, %s296
      %p298 = scmp.lt.s32.totalorder %s297, 16
      %s299 = scalar_select %p298, %s297, 16
      %s300 = smul.u32 128, %s299
      %s301 = smul.u32 %s300, 2
      %p302 = scmp.lt.s32.totalorder %s21, 0
      %s303 = scalar_select %p302, %s21, 0
      %s304 = smul.addr %s303, 8
      %s305 = scalar_lea.vmem %s3, %s304
      %p306 = scmp.lt.s32.totalorder %s21, 0
      %s307 = scalar_select %p306, %s21, 0
      %s308 = smul.addr %s307, 8
      %s309 = scalar_lea.vmem %s4, %s308
      %p310 = scmp.lt.s32.totalorder %s21, 0
      %s311 = scalar_select %p310, %s21, 0
      %s312 = smul.addr %s311, 8
      %s313 = scalar_lea.vmem %s5, %s312
      %s314 = smul.u32 %s21, 2
      %s315 = sadd.s32 %s314, %s22
      %p316 = scmp.eq.s32.totalorder %s22, 0
      // Predicated region
      $region33: #{tpu_custom_call.1} parent=31 // pred_check
        %p317 = pneg %p316
      $region34: #{tpu_custom_call.1} parent=31 // pred_check_branch
        %319 = sbr.rel (%p317) target = $region36
      $region35: #{tpu_custom_call.1} parent=31 // pred_region
        %v320 = vld [vmem:[%s0] sm:$0xff]
        %v321 = vld [vmem:[%s0 + $0x8] sm:$0xff]
        %v322 = vmul.f32 %v320, %v320
        %v323 = vmul.f32 %v321, %v321
        %vm324 = vcmask 523264
        %v325 = vsel %vm324, %v323, 0.0
        %v326 = vadd.f32 %v322, %v325
        %327 = vadd.xlane.f32.xlu0 %v326
        %v328 = vpop.xlane.xlu0 %327
        %v329 = vmax.f32 %v328, 1e-24
        %v330 = vrsqrt.pop %v329
        %v331 = vmul.f32 %v320, %v330
        %v332 = vmul.f32 %v321, %v330
        %333 = vst [vmem:[#allocation2] sm:$0xff] %v331
        %334 = vst.msk [vmem:[#allocation2 + $0x8] sm:$0xff] %vm324, %v332
        %vm335 = vcmask 7168
        %336 = vst.msk [vmem:[#allocation3] sm:$0xff] %vm335, -1e+30
        %337 = vst.msk [vmem:[#allocation4] sm:$0xff] %vm335, 0.0
        %338 = vst.msk [vmem:[#allocation5] sm:$0xff] %vm335, 0.0
      $region36: #{tpu_custom_call.1} parent=31 // pred_fallthru
        _
      %v339 = vld [vmem:[%s291] sm:$0xff]
      %v340 = vld [vmem:[%s291 + $0x8] sm:$0xff]
      %v341 = vld [vmem:[%s291 + $0x10] sm:$0xff]
      %v342 = vld [vmem:[%s291 + $0x18] sm:$0xff]
      %v343 = vld [vmem:[%s291 + $0x20] sm:$0xff]
      %v344 = vld [vmem:[%s291 + $0x28] sm:$0xff]
      %v345 = vld [vmem:[%s291 + $0x30] sm:$0xff]
      %v346 = vld [vmem:[%s291 + $0x38] sm:$0xff]
      %v347 = vld [vmem:[%s291 + $0x40] sm:$0xff]
      %v348 = vld [vmem:[%s291 + $0x48] sm:$0xff]
      %v349 = vld [vmem:[%s291 + $0x50] sm:$0xff]
      %v350 = vld [vmem:[%s291 + $0x58] sm:$0xff]
      %v351 = vld [vmem:[%s291 + $0x60] sm:$0xff]
      %v352 = vld [vmem:[%s291 + $0x68] sm:$0xff]
      %v353 = vld [vmem:[%s291 + $0x70] sm:$0xff]
      %v354 = vld [vmem:[%s291 + $0x78] sm:$0xff]
      %v355 = vld [vmem:[%s291 + $0x80] sm:$0xff]
      %v356 = vld [vmem:[%s291 + $0x88] sm:$0xff]
      %v357 = vld [vmem:[%s291 + $0x90] sm:$0xff]
      %v358 = vld [vmem:[%s291 + $0x98] sm:$0xff]
      %v359 = vld [vmem:[%s291 + $0xa0] sm:$0xff]
      %v360 = vld [vmem:[%s291 + $0xa8] sm:$0xff]
      %v361 = vld [vmem:[%s291 + $0xb0] sm:$0xff]
      %v362 = vld [vmem:[%s291 + $0xb8] sm:$0xff]
      %v363 = vld [vmem:[%s291 + $0xc0] sm:$0xff]
      %v364 = vld [vmem:[%s291 + $0xc8] sm:$0xff]
      %v365 = vld [vmem:[%s291 + $0xd0] sm:$0xff]
      %v366 = vld [vmem:[%s291 + $0xd8] sm:$0xff]
      %v367 = vld [vmem:[%s291 + $0xe0] sm:$0xff]
      %v368 = vld [vmem:[%s291 + $0xe8] sm:$0xff]
      %v369 = vld [vmem:[%s291 + $0xf0] sm:$0xff]
      %v370 = vld [vmem:[%s291 + $0xf8] sm:$0xff]
      %v371 = vmul.f32 %v339, %v339
      %v372 = vmul.f32 %v340, %v340
      %v373 = vmul.f32 %v341, %v341
      %v374 = vmul.f32 %v342, %v342
      %v375 = vmul.f32 %v343, %v343
      %v376 = vmul.f32 %v344, %v344
      %v377 = vmul.f32 %v345, %v345
      %v378 = vmul.f32 %v346, %v346
      %v379 = vmul.f32 %v347, %v347
      %v380 = vmul.f32 %v348, %v348
      %v381 = vmul.f32 %v349, %v349
      %v382 = vmul.f32 %v350, %v350
      %v383 = vmul.f32 %v351, %v351
      %v384 = vmul.f32 %v352, %v352
      %v385 = vmul.f32 %v353, %v353
      %v386 = vmul.f32 %v354, %v354
      %v387 = vmul.f32 %v355, %v355
      %v388 = vmul.f32 %v356, %v356
      %v389 = vmul.f32 %v357, %v357
      %v390 = vmul.f32 %v358, %v358
      %v391 = vmul.f32 %v359, %v359
      %v392 = vmul.f32 %v360, %v360
      %v393 = vmul.f32 %v361, %v361
      %v394 = vmul.f32 %v362, %v362
      %v395 = vmul.f32 %v363, %v363
      %v396 = vmul.f32 %v364, %v364
      %v397 = vmul.f32 %v365, %v365
      %v398 = vmul.f32 %v366, %v366
      %v399 = vmul.f32 %v367, %v367
      %v400 = vmul.f32 %v368, %v368
      %v401 = vmul.f32 %v369, %v369
      %v402 = vmul.f32 %v370, %v370
      %vm403 = vcmask 523264
      %v405 = vsel %vm403, 1.0, 0
      %v408 = vsel %vm403, %v372, 0
      %v411 = vsel %vm403, %v374, 0
      %v414 = vsel %vm403, %v376, 0
      %v417 = vsel %vm403, %v378, 0
      %v420 = vsel %vm403, %v380, 0
      %v423 = vsel %vm403, %v382, 0
      %v426 = vsel %vm403, %v384, 0
      %v429 = vsel %vm403, %v386, 0
      %v432 = vsel %vm403, %v388, 0
      %v435 = vsel %vm403, %v390, 0
      %v438 = vsel %vm403, %v392, 0
      %v441 = vsel %vm403, %v394, 0
      %v444 = vsel %vm403, %v396, 0
      %v447 = vsel %vm403, %v398, 0
      %v450 = vsel %vm403, %v400, 0
      %v453 = vsel %vm403, %v402, 0
      %455 = vmatprep.subr.mxu0 %v408
      %456 = vmatpush1.xpose.msra.mxu0 %v371
      %457 = vmatprep.subr.mxu0 %v411
      %458 = vmatpush1.xpose.msra.mxu0 %v373
      %459 = vmatprep.subr.mxu0 %v414
      %460 = vmatpush1.xpose.msra.mxu0 %v375
      %461 = vmatprep.subr.mxu0 %v417
      %462 = vmatpush1.xpose.msra.mxu0 %v377
      %463 = vmatprep.subr.mxu0 %v420
      %464 = vmatpush1.xpose.msra.mxu0 %v379
      %465 = vmatprep.subr.mxu0 %v423
      %466 = vmatpush1.xpose.msra.mxu0 %v381
      %467 = vmatprep.subr.mxu0 %v426
      %468 = vmatpush1.xpose.msra.mxu0 %v383
      %469 = vmatprep.subr.mxu0 %v429
      %470 = vmatpush1.xpose.msra.mxu0 %v385
      %471 = vmatprep.subr.mxu0 %v432
      %472 = vmatpush1.xpose.msra.mxu0 %v387
      %473 = vmatprep.subr.mxu0 %v435
      %474 = vmatpush1.xpose.msra.mxu0 %v389
      %475 = vmatprep.subr.mxu0 %v438
      %476 = vmatpush1.xpose.msra.mxu0 %v391
      %477 = vmatprep.subr.mxu0 %v441
      %478 = vmatpush1.xpose.msra.mxu0 %v393
      %479 = vmatprep.subr.mxu0 %v444
      %480 = vmatpush1.xpose.msra.mxu0 %v395
      %481 = vmatprep.subr.mxu0 %v447
      %482 = vmatpush1.xpose.msra.mxu0 %v397
      %483 = vmatprep.subr.mxu0 %v450
      %484 = vmatpush1.xpose.msra.mxu0 %v399
      %485 = vmatprep.subr.mxu0 %v453
      %486 = vmatpush1.xpose.msra.mxu0 %v401
      %487 = vmatprep.subr.mxu0 0.0
      %488 = vmatpush1.xpose.msra.mxu0 0.0
      %489 = vmatprep.subr.mxu0 0.0
      %490 = vmatpush1.xpose.msra.mxu0 0.0
      %491 = vmatprep.subr.mxu0 0.0
      %492 = vmatpush1.xpose.msra.mxu0 0.0
      %493 = vmatprep.subr.mxu0 0.0
      %494 = vmatpush1.xpose.msra.mxu0 0.0
      %495 = vmatprep.subr.mxu0 0.0
      %496 = vmatpush1.xpose.msra.mxu0 0.0
      %497 = vmatprep.subr.mxu0 0.0
      %498 = vmatpush1.xpose.msra.mxu0 0.0
      %499 = vmatprep.subr.mxu0 0.0
      %500 = vmatpush1.xpose.msra.mxu0 0.0
      %501 = vmatprep.subr.mxu0 0.0
      %502 = vmatpush1.xpose.msra.mxu0 0.0
      %503 = vmatprep.subr.mxu0 0.0
      %504 = vmatpush1.xpose.msra.mxu0 0.0
      %505 = vmatprep.subr.mxu0 0.0
      %506 = vmatpush1.xpose.msra.mxu0 0.0
      %507 = vmatprep.subr.mxu0 0.0
      %508 = vmatpush1.xpose.msra.mxu0 0.0
      %509 = vmatprep.subr.mxu0 0.0
      %510 = vmatpush1.xpose.msra.mxu0 0.0
      %511 = vmatprep.subr.mxu0 0.0
      %512 = vmatpush1.xpose.msra.mxu0 0.0
      %513 = vmatprep.subr.mxu0 0.0
      %514 = vmatpush1.xpose.msra.mxu0 0.0
      %515 = vmatprep.subr.mxu0 0.0
      %516 = vmatpush1.xpose.msra.mxu0 0.0
      %517 = vmatprep.subr.mxu0 0.0
      %518 = vmatpush1.xpose.msra.mxu0 0.0
      %519 = vmatprep.mubr.f32.mxu0 %v405
      %520 = vmatmul.mubr.f32.gmra.mrb[0].mxu0 1.0
      %v521 = vpop.f32.mrb[0].mxu0
      %v522 = vadd.f32 0.0, %v521
      %v523 = vpop.f32.mrb[0].mxu0
      %524 = vdwg.mxu0
      %v525 = vmax.f32 %v522, 1e-24
      %v526 = vrsqrt.pop %v525
      %v527 = vld [vmem:[#allocation2] sm:$0xff]
      %v528 = vld [vmem:[#allocation2 + $0x8] sm:$0xff]
      %v530 = vsel %vm403, %v528, 0
      %v533 = vsel %vm403, %v340, 0
      %v536 = vsel %vm403, %v342, 0
      %v539 = vsel %vm403, %v344, 0
      %v542 = vsel %vm403, %v346, 0
      %v545 = vsel %vm403, %v348, 0
      %v548 = vsel %vm403, %v350, 0
      %v551 = vsel %vm403, %v352, 0
      %v554 = vsel %vm403, %v354, 0
      %v557 = vsel %vm403, %v356, 0
      %v560 = vsel %vm403, %v358, 0
      %v563 = vsel %vm403, %v360, 0
      %v566 = vsel %vm403, %v362, 0
      %v569 = vsel %vm403, %v364, 0
      %v572 = vsel %vm403, %v366, 0
      %v575 = vsel %vm403, %v368, 0
      %v578 = vsel %vm403, %v370, 0
      %580 = vmatprep.subr.mxu0 %v533
      %581 = vmatpush1.xpose.msra.mxu0 %v339
      %582 = vmatprep.subr.mxu0 %v536
      %583 = vmatpush1.xpose.msra.mxu0 %v341
      %584 = vmatprep.subr.mxu0 %v539
      %585 = vmatpush1.xpose.msra.mxu0 %v343
      %586 = vmatprep.subr.mxu0 %v542
      %587 = vmatpush1.xpose.msra.mxu0 %v345
      %588 = vmatprep.subr.mxu0 %v545
      %589 = vmatpush1.xpose.msra.mxu0 %v347
      %590 = vmatprep.subr.mxu0 %v548
      %591 = vmatpush1.xpose.msra.mxu0 %v349
      %592 = vmatprep.subr.mxu0 %v551
      %593 = vmatpush1.xpose.msra.mxu0 %v351
      %594 = vmatprep.subr.mxu0 %v554
      %595 = vmatpush1.xpose.msra.mxu0 %v353
      %596 = vmatprep.subr.mxu0 %v557
      %597 = vmatpush1.xpose.msra.mxu0 %v355
      %598 = vmatprep.subr.mxu0 %v560
      %599 = vmatpush1.xpose.msra.mxu0 %v357
      %600 = vmatprep.subr.mxu0 %v563
      %601 = vmatpush1.xpose.msra.mxu0 %v359
      %602 = vmatprep.subr.mxu0 %v566
      %603 = vmatpush1.xpose.msra.mxu0 %v361
      %604 = vmatprep.subr.mxu0 %v569
      %605 = vmatpush1.xpose.msra.mxu0 %v363
      %606 = vmatprep.subr.mxu0 %v572
      %607 = vmatpush1.xpose.msra.mxu0 %v365
      %608 = vmatprep.subr.mxu0 %v575
      %609 = vmatpush1.xpose.msra.mxu0 %v367
      %610 = vmatprep.subr.mxu0 %v578
      %611 = vmatpush1.xpose.msra.mxu0 %v369
      %612 = vmatprep.subr.mxu0 0.0
      %613 = vmatpush1.xpose.msra.mxu0 0.0
      %614 = vmatprep.subr.mxu0 0.0
      %615 = vmatpush1.xpose.msra.mxu0 0.0
      %616 = vmatprep.subr.mxu0 0.0
      %617 = vmatpush1.xpose.msra.mxu0 0.0
      %618 = vmatprep.subr.mxu0 0.0
      %619 = vmatpush1.xpose.msra.mxu0 0.0
      %620 = vmatprep.subr.mxu0 0.0
      %621 = vmatpush1.xpose.msra.mxu0 0.0
      %622 = vmatprep.subr.mxu0 0.0
      %623 = vmatpush1.xpose.msra.mxu0 0.0
      %624 = vmatprep.subr.mxu0 0.0
      %625 = vmatpush1.xpose.msra.mxu0 0.0
      %626 = vmatprep.subr.mxu0 0.0
      %627 = vmatpush1.xpose.msra.mxu0 0.0
      %628 = vmatprep.subr.mxu0 0.0
      %629 = vmatpush1.xpose.msra.mxu0 0.0
      %630 = vmatprep.subr.mxu0 0.0
      %631 = vmatpush1.xpose.msra.mxu0 0.0
      %632 = vmatprep.subr.mxu0 0.0
      %633 = vmatpush1.xpose.msra.mxu0 0.0
      %634 = vmatprep.subr.mxu0 0.0
      %635 = vmatpush1.xpose.msra.mxu0 0.0
      %636 = vmatprep.subr.mxu0 0.0
      %637 = vmatpush1.xpose.msra.mxu0 0.0
      %638 = vmatprep.subr.mxu0 0.0
      %639 = vmatpush1.xpose.msra.mxu0 0.0
      %640 = vmatprep.subr.mxu0 0.0
      %641 = vmatpush1.xpose.msra.mxu0 0.0
      %642 = vmatprep.subr.mxu0 0.0
      %643 = vmatpush1.xpose.msra.mxu0 0.0
      %644 = vmatprep.mubr.f32.mxu0 %v530
      %645 = vmatmul.mubr.f32.gmra.mrb[0].mxu0 %v527
      %v646 = vpop.f32.mrb[0].mxu0
      %v647 = vadd.f32 0.0, %v646
      %v648 = vpop.f32.mrb[0].mxu0
      %649 = vdwg.mxu0
      %v650 = vlaneseq
      %v651 = vshrl.u32 %v650, 7
      %v652 = vsub.s32 0, %v651
      %v653 = vrot.slane %v526, %v652
      %v654 = vmul.f32 %v647, %v653
      %v655 = vmul.f32 %v654, %v654
      %v656 = vsub.f32 1.0, %v655
      %v657 = vmax.f32 %v656, 0.0
      %v658 = vmin.f32 %v657, 1.0
      %v659 = vrsqrt.pop %v658
      %v660 = vmul.f32 %v658, %v659
      %vm661 = vcmp.eq.f32.partialorder %v658, inf
      %v662 = vsel %vm661, %v658, %v660
      %vm663 = vcmp.eq.f32.partialorder %v658, 0.0
      %v664 = vand.u32 %v658, 2147483648
      %v665 = vsel %vm663, %v664, %v662
      %v666 = vmul.f32 %v654, 0.9800666
      %v667 = vmul.f32 %v665, 0.19866933
      %v668 = vsub.f32 %v666, %v667
      %v669 = vsub.f32 %v654, -0.9800666
      %vm670 = vcmp.gt.f32.partialorder %v669, 0.0
      %v671 = vsub.f32 %v654, 0.039733864
      %v672 = vsel %vm670, %v668, %v671
      %v673 = vlaneseq
      %v674 = vand.u32 %v673, 127
      %v675 = vld [vmem:[%s2] sm:$0xff]
      %s676 = smul.u32 %s315, 128
      %v677 = vstv %s676
      %v678 = vsub.s32 %v675, %v677
      %679 = vset.pattern.permute.xlu0 0
      %680 = vperm.xlu0 %679, %v678
      %v681 = vpop.permute.xlu0 %680
      %vm682 = vcmp.eq.s32.totalorder %v674, %v681
      %v683 = vsel %vm682, %v672, %v654
      %v684 = vmul.f32 %v683, 30.0
      %s685 = ssub.s32 200, %s676
      %v686 = vstv %s685
      %vm687 = vcmp.lt.s32.totalorder %v674, %v686
      %v688 = vsel %vm687, %v684, -1e+30
      %v689 = vld [vmem:[#allocation5] sm:$0xff]
      %v690 = vsel %vm682, %v672, 0.0
      %691 = vadd.xlane.f32.xlu0 %v690
      %v692 = vpop.xlane.xlu0 %691
      %v693 = vmul.f32 %v692, 30.0
      %v694 = vadd.f32 %v689, %v693
      %vm695 = vcmask 7168
      %696 = vst.msk [vmem:[#allocation5] sm:$0xff] %vm695, %v694
      %v697 = vld [vmem:[#allocation3] sm:$0xff]
      %698 = vmax.xlane.f32.xlu0 %v688
      %v699 = vpop.xlane.xlu0 %698
      %v700 = vmax.f32 %v697, %v699
      %v701 = vld [vmem:[#allocation4] sm:$0xff]
      %v702 = vsub.f32 %v697, %v700
      %v703 = vmul.f32 %v702, 1.442695
      %v704 = vpow.pop %v703
      %v705 = vmul.f32 %v701, %v704
      %707 = vset.pattern.permute.xlu0 0
      %708 = vperm.xlu0 %707, %v700
      %v709 = vpop.permute.xlu0 %708
      %v711 = vsub.f32 %v688, %v709
      %v712 = vmul.f32 %v711, 1.442695
      %v713 = vpow.pop %v712
      %714 = vadd.xlane.f32.xlu0 %v713
      %v715 = vpop.xlane.xlu0 %714
      %v716 = vadd.f32 %v705, %v715
      %717 = vst.msk [vmem:[#allocation4] sm:$0xff] %vm695, %v716
      %718 = vst.msk [vmem:[#allocation3] sm:$0xff] %vm695, %v700
      %p719 = scmp.eq.s32.totalorder %s22, 1
      // Predicated region
      $region37: #{tpu_custom_call.1} parent=31 // pred_check
        %p720 = pneg %p719
      $region38: #{tpu_custom_call.1} parent=31 // pred_check_branch
        %722 = sbr.rel (%p720) target = $region40
      $region39: #{tpu_custom_call.1} parent=31 // pred_region
        %v723 = vld [vmem:[#allocation3] sm:$0xff]
        %724 = vst.msk [vmem:[%s305] sm:$0xff] %vm695, %v723
        %v725 = vld [vmem:[#allocation4] sm:$0xff]
        %726 = vst.msk [vmem:[%s309] sm:$0xff] %vm695, %v725
        %v727 = vld [vmem:[#allocation5] sm:$0xff]
        %728 = vst.msk [vmem:[%s313] sm:$0xff] %vm695, %v727
      $region40: #{tpu_custom_call.1} parent=31 // pred_fallthru
        _
      %p729 = scmp.lt.s32.totalorder %s21, 0
      %s730 = scalar_select %p729, %s21, 0
      %s731 = smul.addr %s730, 8
      %s732 = scalar_lea.vmem %s3, %s731
      %p733 = scmp.lt.s32.totalorder %s21, 0
      %s734 = scalar_select %p733, %s21, 0
      %s735 = smul.addr %s734, 8
      %s736 = scalar_lea.vmem %s4, %s735
      %p737 = scmp.lt.s32.totalorder %s21, 0
      %s738 = scalar_select %p737, %s21, 0
      %s739 = smul.addr %s738, 8
      %s740 = scalar_lea.vmem %s5, %s739
      // Predicated region
      $region41: #{tpu_custom_call.1} parent=31 // pred_check
        %p741 = pneg %p123
      $region42: #{tpu_custom_call.1} parent=31 // pred_check_branch
        %743 = sbr.rel (%p741) target = $region44
      $region43: #{tpu_custom_call.1} parent=31 // pred_region
        _
      $region44: #{tpu_custom_call.1} parent=31 // pred_fallthru
        _
      // Predicated region
      $region45: #{tpu_custom_call.1} parent=31 // pred_check
        %p744 = pneg %p149
      $region46: #{tpu_custom_call.1} parent=31 // pred_check_branch
        %746 = sbr.rel (%p744) target = $region48
      $region47: #{tpu_custom_call.1} parent=31 // pred_region
        _
      $region48: #{tpu_custom_call.1} parent=31 // pred_fallthru
        _
      // Predicated region
      $region49: #{tpu_custom_call.1} parent=31 // pred_check
        %p747 = pneg %p175
      $region50: #{tpu_custom_call.1} parent=31 // pred_check_branch
        %749 = sbr.rel (%p747) target = $region52
      $region51: #{tpu_custom_call.1} parent=31 // pred_region
        _
      $region52: #{tpu_custom_call.1} parent=31 // pred_fallthru
        _
      // Predicated region
      $region53: #{tpu_custom_call.1} parent=31 // pred_check
        %p750 = pneg %p123
      $region54: #{tpu_custom_call.1} parent=31 // pred_check_branch
        %752 = sbr.rel (%p750) target = $region56
      $region55: #{tpu_custom_call.1} parent=31 // pred_region
        %p753 = scmp.lt.s32.totalorder %s21, 0
        %s754 = scalar_select %p753, %s21, 0
        %s755 = smul.addr %s754, 8
        %s756 = scalar_lea.vmem %s3, %s755
      $region56: #{tpu_custom_call.1} parent=31 // pred_fallthru
        _
      // Predicated region
      $region57: #{tpu_custom_call.1} parent=31 // pred_check
        %p757 = pneg %p149
      $region58: #{tpu_custom_call.1} parent=31 // pred_check_branch
        %759 = sbr.rel (%p757) target = $region60
      $region59: #{tpu_custom_call.1} parent=31 // pred_region
        %p760 = scmp.lt.s32.totalorder %s21, 0
        %s761 = scalar_select %p760, %s21, 0
        %s762 = smul.addr %s761, 8
        %s763 = scalar_lea.vmem %s4, %s762
      $region60: #{tpu_custom_call.1} parent=31 // pred_fallthru
        _
      // Predicated region
      $region61: #{tpu_custom_call.1} parent=31 // pred_check
        %p764 = pneg %p175
      $region62: #{tpu_custom_call.1} parent=31 // pred_check_branch
        %766 = sbr.rel (%p764) target = $region64
      $region63: #{tpu_custom_call.1} parent=31 // pred_region
        %p767 = scmp.lt.s32.totalorder %s21, 0
        %s768 = scalar_select %p767, %s21, 0
        %s769 = smul.addr %s768, 8
        %s770 = scalar_lea.vmem %s5, %s769
      $region64: #{tpu_custom_call.1} parent=31 // pred_fallthru
        _
    $region32: #{tpu_custom_call.1} parent=5 // pred_fallthru
      _
    %p771 = scmp.le.s32.totalorder 2, %s12
    // Predicated region
    $region65: #{tpu_custom_call.1} parent=5 // pred_check
      %p772 = pneg %p771
    $region66: #{tpu_custom_call.1} parent=5 // pred_check_branch
      %774 = sbr.rel (%p772) target = $region68
    $region67: #{tpu_custom_call.1} parent=5 // pred_region
      %s775 = ssub.s32 %s12, 2
    $region68: #{tpu_custom_call.1} parent=5 // pred_fallthru
      _
  $region6: #{tpu_custom_call.1} parent=0 // loop_footer
    %s16 = sadd.s32 1, %s12
  $region7: #{tpu_custom_call.1} parent=0 // loop_footer_branch
    %11 = sbr.rel target = $region3
  $region8: #{tpu_custom_call.1} parent=0 // loop_exit
    _

</llo_original>
